<compile_context>
chip_gen: v5e
topology: v5e:2x2
jax: 0.10.0
libtpu: 0.0.40
codegen_flags: <defaults>
</compile_context>

<pallas_src>
import jax
import jax.numpy as jnp
from jax import lax
from jax.experimental import pallas as pl
from jax.experimental.pallas import tpu as pltpu


def _embeddings_kernel(patches_ref, w_ref, add_ref, out_ref):
    """One grid step = Bt images.

    patches_ref: (Bt, S, K) bf16, row 0 of every image is all-zero (CLS slot)
    w_ref:       (K, H)     bf16  resident across the grid
    add_ref:     (S, H)     f32   row 0 = cls + pos[0]; rows 1.. = pos + conv bias
    out_ref:     (Bt, S, H)
    """
    w = w_ref[...]
    add = add_ref[...]
    bt = patches_ref.shape[0]
    # Static unroll over the (small, compile-time) batch tile: each image is a
    # single aligned (S, K) x (K, H) MXU matmul + broadcast add + aligned store.
    for b in range(bt):
        proj = jnp.dot(patches_ref[b], w, preferred_element_type=jnp.float32)
        out_ref[b] = (proj + add).astype(out_ref.dtype)
    # TODO(synk): Dropout is identity at inference; training-mode dropout with
    # pltpu.prng_* is not implemented here.


def _pick_batch_tile(B, S, K, H, out_itemsize, max_bt=4,
                     vmem_budget=12 * 1024 * 1024):
    """Largest divisor of B (<= max_bt) whose double-buffered blocks fit VMEM."""
    resident = 2 * (K * H * 2 + S * H * 4)               # weight + add table
    for bt in range(min(max_bt, B), 0, -1):
        if B % bt:
            continue
        streamed = 2 * bt * S * (K * 2 + H * out_itemsize)   # patches + output
        if resident + streamed <= vmem_budget:
            return bt
    return 1


def vit_embeddings(x, conv_w, conv_b, cls_token, pos_emb, patch_size,
                   out_dtype=None):
    """x: (B, C, H, W).  conv_w: (hidden, C, ph, pw).  Returns (B, NP+1, hidden)."""
    B, C, H, W = x.shape
    ph, pw = patch_size
    gh, gw = H // ph, W // pw
    NP = gh * gw
    S = NP + 1
    hidden = conv_w.shape[0]
    K = C * ph * pw
    out_dtype = x.dtype if out_dtype is None else out_dtype
    out_itemsize = jnp.dtype(out_dtype).itemsize

    # Patch extraction (B,C,H,W) -> (B,NP,K), per-patch feature order (c,i,j),
    # matching Conv2d(stride=patch) -> flatten(2) -> transpose(-1,-2).  A single
    # all-zero row is prepended per image so the matmul produces the full (S,H)
    # sequence (row 0 == 0 -> CLS slot): no in-kernel concat / offset store.
    # bf16 cast halves the DMA'd bytes; the MXU accumulates in f32.
    patches = x.reshape(B, C, gh, ph, gw, pw)
    patches = patches.transpose(0, 2, 4, 1, 3, 5).reshape(B, NP, K)
    patches = jnp.pad(patches, ((0, 0), (1, 0), (0, 0))).astype(jnp.bfloat16)
    # TODO(synk): verify in HLO/xprof that allow_input_fusion really fuses this
    # reshape/transpose/pad/cast chain into the pallas_call input path; if not,
    # fall back to in-kernel patch extraction (grid over (B, gh), DMA row slabs
    # of un-transposed x and rearrange in VMEM on the idle XLU).

    w_mat = conv_w.reshape(hidden, K).T.astype(jnp.bfloat16)        # (K, hidden)

    # Fold conv bias + CLS token into the position-embedding table (f32, exact).
    pos = pos_emb.reshape(S, hidden).astype(jnp.float32)
    add_tbl = jnp.concatenate(
        [cls_token.reshape(1, hidden).astype(jnp.float32) + pos[0:1, :],
         pos[1:, :] + conv_b.reshape(1, hidden).astype(jnp.float32)],
        axis=0)                                                      # (S, hidden)

    Bt = _pick_batch_tile(B, S, K, hidden, out_itemsize)

    cost = pl.CostEstimate(
        flops=2 * B * S * K * hidden,
        transcendentals=0,
        bytes_accessed=(B * S * K * 2            # patches (bf16)
                        + K * hidden * 2         # weight (bf16)
                        + S * hidden * 4         # add table (f32)
                        + B * S * hidden * out_itemsize))

    return pl.pallas_call(
        _embeddings_kernel,
        out_shape=jax.ShapeDtypeStruct((B, S, hidden), out_dtype),
        grid=(B // Bt,),
        in_specs=[
            pl.BlockSpec((Bt, S, K), lambda i: (i, 0, 0)),      # streamed patches
            pl.BlockSpec((K, hidden), lambda i: (0, 0)),        # resident weight
            pl.BlockSpec((S, hidden), lambda i: (0, 0)),        # resident add table
        ],
        out_specs=pl.BlockSpec((Bt, S, hidden), lambda i: (i, 0, 0)),
        compiler_params=pltpu.CompilerParams(
            dimension_semantics=("parallel",),          # batch-parallel (both TCs)
            allow_input_fusion=[True, False, False],    # fuse patch transpose/pad/cast
        ),
        cost_estimate=cost,
    )(patches, w_mat, add_tbl)


def _reference(x, conv_w, conv_b, cls_token, pos_emb, patch_size):
    """Pure-JAX f32 reference mirroring the PyTorch forward exactly."""
    B = x.shape[0]
    hidden = conv_w.shape[0]
    y = lax.conv_general_dilated(
        x, conv_w, window_strides=patch_size, padding="VALID",
        dimension_numbers=("NCHW", "OIHW", "NCHW"))
    y = y + conv_b.reshape(1, hidden, 1, 1)
    y = y.reshape(B, hidden, -1)            # flatten(2)
    y = jnp.transpose(y, (0, 2, 1))         # transpose(-1, -2)
    cls = jnp.broadcast_to(cls_token, (B, 1, hidden))
    y = jnp.concatenate([cls, y], axis=1)
    return y + pos_emb                      # dropout(eval) == identity


if __name__ == "__main__":
    # Small, consistent shapes: C=4, img=16x16, patch=4x4, hidden=32.
    patch_size = (4, 4)
    hidden = 32
    C, H, W = 4, 16, 16
    n_patches = (H // patch_size[0]) * (W // patch_size[1])

    key = jax.random.PRNGKey(0)
    kw, kb, kc, kp, kx1, kx2 = jax.random.split(key, 6)
    conv_w = jax.random.normal(kw, (hidden, C, *patch_size), jnp.float32) * 0.05
    conv_b = jax.random.normal(kb, (hidden,), jnp.float32) * 0.05
    # nn.Parameter(torch.zeros(...)) in the module; deterministic random values
    # here so the test is non-trivial.
    cls_token = jax.random.normal(kc, (1, 1, hidden), jnp.float32) * 0.02
    pos_emb = jax.random.normal(kp, (1, n_patches + 1, hidden), jnp.float32) * 0.02

    # B=2 exercises Bt=2 / single grid step; B=5 exercises Bt=1 / 5-step grid.
    for B, kx in ((2, kx1), (5, kx2)):
        x = jax.random.normal(kx, (B, C, H, W), jnp.float32)
        out = jax.block_until_ready(
            vit_embeddings(x, conv_w, conv_b, cls_token, pos_emb, patch_size))
        ref = _reference(x, conv_w, conv_b, cls_token, pos_emb, patch_size)
        assert out.shape == (B, n_patches + 1, hidden), out.shape
        # bf16 matmul operands (f32 accumulation) -> loosened tolerance vs f32 ref.
        max_err = float(jnp.max(jnp.abs(out - ref)))
        assert jnp.allclose(out, ref, atol=1e-2, rtol=1e-2), max_err

    print("KERNEL_OK")
</pallas_src>

<mosaic_0001>
module attributes {stable_mosaic.version = 11 : i64} {
  func.func @_embeddings_kernel(%arg0: i32, %arg1: memref<2x17x64xbf16, #tpu.memory_space<vmem>>, %arg2: memref<64x32xbf16, #tpu.memory_space<vmem>>, %arg3: memref<17x32xf32, #tpu.memory_space<vmem>>, %arg4: memref<2x17x32xf32, #tpu.memory_space<vmem>>) attributes {dimension_semantics = [#tpu.dimension_semantics<parallel>], iteration_bounds = array<i64: 1>, scalar_prefetch = 0 : i64, scratch_operands = 0 : i64, tpu.core_type = #tpu.core_type<tc>, window_params = [{transform_indices = @transform_0, window_bounds = array<i64: 2, 17, 64>}, {pipeline_mode = #tpu.pipeline_mode<synchronous>, transform_indices = @transform_1, window_bounds = array<i64: 64, 32>}, {pipeline_mode = #tpu.pipeline_mode<synchronous>, transform_indices = @transform_2, window_bounds = array<i64: 17, 32>}, {transform_indices = @transform_3, window_bounds = array<i64: 2, 17, 32>}]} {
    %c0 = arith.constant 0 : index
    %c0_0 = arith.constant 0 : index
    %0 = vector.load %arg2[%c0, %c0_0] : memref<64x32xbf16, #tpu.memory_space<vmem>>, vector<64x32xbf16>
    %c0_1 = arith.constant 0 : index
    %c0_2 = arith.constant 0 : index
    %1 = vector.load %arg3[%c0_1, %c0_2] : memref<17x32xf32, #tpu.memory_space<vmem>>, vector<17x32xf32>
    %c0_3 = arith.constant 0 : index
    %c0_4 = arith.constant 0 : index
    %c0_5 = arith.constant 0 : index
    %2 = vector.load %arg1[%c0_3, %c0_4, %c0_5] : memref<2x17x64xbf16, #tpu.memory_space<vmem>>, vector<1x17x64xbf16>
    %3 = vector.shape_cast %2 : vector<1x17x64xbf16> to vector<17x64xbf16>
    %cst = arith.constant dense<0.000000e+00> : vector<17x32xf32>
    %4 = tpu.matmul %3, %0, %cst {dimension_numbers = #tpu.dot_dimension_numbers<[1], [0], [0], [1], [0, 0, 1, 1], [], []>} : vector<17x64xbf16>, vector<64x32xbf16>, vector<17x32xf32> -> vector<17x32xf32>
    %5 = arith.addf %4, %1 : vector<17x32xf32>
    %c0_6 = arith.constant 0 : index
    %c0_7 = arith.constant 0 : index
    %c0_8 = arith.constant 0 : index
    %6 = vector.load %arg4[%c0_6, %c0_7, %c0_8] : memref<2x17x32xf32, #tpu.memory_space<vmem>>, vector<1x17x32xf32>
    %7 = vector.shape_cast %6 : vector<1x17x32xf32> to vector<17x32xf32>
    %8 = vector.shape_cast %5 : vector<17x32xf32> to vector<1x17x32xf32>
    tpu.vector_store %arg4[%c0_6, %c0_7, %c0_8], %8 {strides = array<i32>} : memref<2x17x32xf32, #tpu.memory_space<vmem>>, vector<1x17x32xf32>,
    %c1 = arith.constant 1 : index
    %c0_9 = arith.constant 0 : index
    %c0_10 = arith.constant 0 : index
    %9 = vector.load %arg1[%c1, %c0_9, %c0_10] : memref<2x17x64xbf16, #tpu.memory_space<vmem>>, vector<1x17x64xbf16>
    %10 = vector.shape_cast %9 : vector<1x17x64xbf16> to vector<17x64xbf16>
    %cst_11 = arith.constant dense<0.000000e+00> : vector<17x32xf32>
    %11 = tpu.matmul %10, %0, %cst_11 {dimension_numbers = #tpu.dot_dimension_numbers<[1], [0], [0], [1], [0, 0, 1, 1], [], []>} : vector<17x64xbf16>, vector<64x32xbf16>, vector<17x32xf32> -> vector<17x32xf32>
    %12 = arith.addf %11, %1 : vector<17x32xf32>
    %c1_12 = arith.constant 1 : index
    %c0_13 = arith.constant 0 : index
    %c0_14 = arith.constant 0 : index
    %13 = vector.load %arg4[%c1_12, %c0_13, %c0_14] : memref<2x17x32xf32, #tpu.memory_space<vmem>>, vector<1x17x32xf32>
    %14 = vector.shape_cast %13 : vector<1x17x32xf32> to vector<17x32xf32>
    %15 = vector.shape_cast %12 : vector<17x32xf32> to vector<1x17x32xf32>
    tpu.vector_store %arg4[%c1_12, %c0_13, %c0_14], %15 {strides = array<i32>} : memref<2x17x32xf32, #tpu.memory_space<vmem>>, vector<1x17x32xf32>,
    return
  }
  func.func @transform_0(%arg0: i32) -> (i32, i32, i32) {
    %c0_i32 = arith.constant 0 : i32
    %c0_i32_0 = arith.constant 0 : i32
    %c0_i32_1 = arith.constant 0 : i32
    return %arg0, %c0_i32, %c0_i32_0 : i32, i32, i32
  }
  func.func @transform_1(%arg0: i32) -> (i32, i32) {
    %c0_i32 = arith.constant 0 : i32
    %c0_i32_0 = arith.constant 0 : i32
    %c0_i32_1 = arith.constant 0 : i32
    return %c0_i32, %c0_i32_0 : i32, i32
  }
  func.func @transform_2(%arg0: i32) -> (i32, i32) {
    %c0_i32 = arith.constant 0 : i32
    %c0_i32_0 = arith.constant 0 : i32
    %c0_i32_1 = arith.constant 0 : i32
    return %c0_i32, %c0_i32_0 : i32, i32
  }
  func.func @transform_3(%arg0: i32) -> (i32, i32, i32) {
    %c0_i32 = arith.constant 0 : i32
    %c0_i32_0 = arith.constant 0 : i32
    %c0_i32_1 = arith.constant 0 : i32
    return %arg0, %c0_i32, %c0_i32_0 : i32, i32, i32
  }
}

</mosaic_0001>

<llo_original>
// kernel: tpu_custom_call.1
$region0: #{tpu_custom_call.1}
  #allocation0 [shape = 'u32[]', space=smem, size = 0x4, offset = 0x4, fixed_abs, tag = 'smem constant byte address 0x4 - core index']
  #allocation1 [shape = 'u32[72,128]{1,0:T(1,128)}', space=vmem, size = 0x9000, scoped, tag = 'internal scratch']
  %s0 = inlined_call_operand.vmem [shape: bf16[2,17,64], index: 0, kind: input, shape index: {}]
  %s1 = inlined_call_operand.vmem [shape: bf16[64,32], index: 1, kind: input, shape index: {}]
  %s2 = inlined_call_operand.vmem [shape: f32[17,32], index: 2, kind: input, shape index: {}]
  %s3 = inlined_call_operand.vmem [shape: f32[2,17,32], index: 3, kind: output, shape index: {}]
  %s4 = sld [smem:[#allocation0]]
  $region22: #{tpu_custom_call.1} parent=0
    _
  %s6 = ssub.s32 1, %s4
  %s7 = scalar_select 0, %s6, %s4
  // Predicated region
  $region2: #{tpu_custom_call.1} parent=0 // pred_check
    _
  $region3: #{tpu_custom_call.1} parent=0 // pred_check_branch
    %9 = sbr.rel (0) target = $region5
  $region4: #{tpu_custom_call.1} parent=0 // pred_region
    _
  $region5: #{tpu_custom_call.1} parent=0 // pred_fallthru
    _
  // Predicated region
  $region6: #{tpu_custom_call.1} parent=0 // pred_check
    _
  $region7: #{tpu_custom_call.1} parent=0 // pred_check_branch
    %11 = sbr.rel (0) target = $region9
  $region8: #{tpu_custom_call.1} parent=0 // pred_region
    _
  $region9: #{tpu_custom_call.1} parent=0 // pred_fallthru
    _
  // Predicated region
  $region10: #{tpu_custom_call.1} parent=0 // pred_check
    _
  $region11: #{tpu_custom_call.1} parent=0 // pred_check_branch
    %13 = sbr.rel (0) target = $region13
  $region12: #{tpu_custom_call.1} parent=0 // pred_region
    _
  $region13: #{tpu_custom_call.1} parent=0 // pred_fallthru
    _
  %v15 = vld [vmem:[%s1] sm:$0xf]
  %v16 = vld [vmem:[%s1 + $0x4] sm:$0xf]
  %v17 = vld [vmem:[%s1 + $0x8] sm:$0xf]
  %v18 = vld [vmem:[%s1 + $0xc] sm:$0xf]
  %v19 = vld [vmem:[%s1 + $0x10] sm:$0xf]
  %v20 = vld [vmem:[%s1 + $0x14] sm:$0xf]
  %v21 = vld [vmem:[%s1 + $0x18] sm:$0xf]
  %v22 = vld [vmem:[%s1 + $0x1c] sm:$0xf]
  %v23 = vld [vmem:[%s2] sm:$0xff]
  %v24 = vld [vmem:[%s2 + $0x8] sm:$0xff]
  %v25 = vld [vmem:[%s2 + $0x10] sm:$0x1]
  %v26 = vld [vmem:[%s0] sm:$0xf]
  %v27 = vld [vmem:[%s0 + $0x4] sm:$0xf]
  %v28 = vld [vmem:[%s0 + $0x8] sm:$0x1]
  %v32 = vunpack.c.l.b16 %v26
  %v33 = vunpack.c.l.b16 %v27
  %v34 = vunpack.c.l.b16 %v28
  %v35 = vpack.c.b16 %v33, %v32
  %v36 = vpack.c.b16 %v34, %v34
  %v45 = vunpack.c.l.b16 %v15
  %v46 = vunpack.c.l.b16 %v16
  %v47 = vunpack.c.l.b16 %v17
  %v48 = vunpack.c.l.b16 %v18
  %v49 = vunpack.c.l.b16 %v19
  %v50 = vunpack.c.l.b16 %v20
  %v51 = vunpack.c.l.b16 %v21
  %v52 = vunpack.c.l.b16 %v22
  %v53 = vpack.c.b16 %v46, %v45
  %v54 = vpack.c.b16 %v48, %v47
  %v55 = vpack.c.b16 %v50, %v49
  %v56 = vpack.c.b16 %v52, %v51
  %vm61 = vcmask 523264
  %v63 = vsel %vm61, %v35, 0
  %v66 = vsel %vm61, %v36, 0
  %68 = vmatpush.bf16.msra.mxu0 0
  %69 = vmatpush.bf16.msra.mxu0 0
  %70 = vmatpush.bf16.msra.mxu0 0
  %71 = vmatpush.bf16.msra.mxu0 0
  %72 = vmatpush.bf16.msra.mxu0 %v56
  %73 = vmatpush.bf16.msra.mxu0 %v55
  %74 = vmatpush.bf16.msra.mxu0 %v54
  %75 = vmatpush.bf16.msra.mxu0 %v53
  %76 = vmatmul.bf16.gmra.mxu0 %v63
  %v77 = vpop.f32.mrf.mxu0
  %v78 = vadd.f32 %v23, %v77
  %v79 = vpop.f32.mrf.mxu0
  %v80 = vadd.f32 %v24, %v79
  %81 = vmatmul.bf16.gmra.mxu0 %v66
  %v82 = vpop.f32.mrf.mxu0
  %v83 = vadd.f32 %v25, %v82
  %v84 = vpop.f32.mrf.mxu0
  %85 = vdwg.mxu0
  %vm86 = vcmask 261120
  %87 = vst.msk [vmem:[%s3] sm:$0xff] %vm86, %v78
  %88 = vst.msk [vmem:[%s3 + $0x8] sm:$0xff] %vm86, %v80
  %vm89 = vcmask 253952
  %90 = vst.msk [vmem:[%s3 + $0x10] sm:$0x1] %vm89, %v83
  %s91 = scalar_lea.vmem %s0, 12
  %v92 = vld [vmem:[%s91] sm:$0xf]
  %v93 = vld [vmem:[%s91 + $0x4] sm:$0xf]
  %v94 = vld [vmem:[%s91 + $0x8] sm:$0x1]
  %v98 = vunpack.c.l.b16 %v92
  %v99 = vunpack.c.l.b16 %v93
  %v100 = vunpack.c.l.b16 %v94
  %v101 = vpack.c.b16 %v99, %v98
  %v102 = vpack.c.b16 %v100, %v100
  %v104 = vsel %vm61, %v101, 0
  %v107 = vsel %vm61, %v102, 0
  %109 = vmatpush.bf16.msra.mxu0 0
  %110 = vmatpush.bf16.msra.mxu0 0
  %111 = vmatpush.bf16.msra.mxu0 0
  %112 = vmatpush.bf16.msra.mxu0 0
  %113 = vmatpush.bf16.msra.mxu0 %v56
  %114 = vmatpush.bf16.msra.mxu0 %v55
  %115 = vmatpush.bf16.msra.mxu0 %v54
  %116 = vmatpush.bf16.msra.mxu0 %v53
  %117 = vmatmul.bf16.gmra.mxu0 %v104
  %v118 = vpop.f32.mrf.mxu0
  %v119 = vadd.f32 %v23, %v118
  %v120 = vpop.f32.mrf.mxu0
  %v121 = vadd.f32 %v24, %v120
  %122 = vmatmul.bf16.gmra.mxu0 %v107
  %v123 = vpop.f32.mrf.mxu0
  %v124 = vadd.f32 %v25, %v123
  %v125 = vpop.f32.mrf.mxu0
  %126 = vdwg.mxu0
  %s127 = scalar_lea.vmem %s3, 24
  %128 = vst.msk [vmem:[%s127] sm:$0xff] %vm86, %v119
  %129 = vst.msk [vmem:[%s127 + $0x8] sm:$0xff] %vm86, %v121
  %130 = vst.msk [vmem:[%s127 + $0x10] sm:$0x1] %vm89, %v124
  // Predicated region
  $region14: #{tpu_custom_call.1} parent=0 // pred_check
    _
  $region15: #{tpu_custom_call.1} parent=0 // pred_check_branch
    %132 = sbr.rel (0) target = $region17
  $region16: #{tpu_custom_call.1} parent=0 // pred_region
    _
  $region17: #{tpu_custom_call.1} parent=0 // pred_fallthru
    _
  // Predicated region
  $region18: #{tpu_custom_call.1} parent=0 // pred_check
    _
  $region19: #{tpu_custom_call.1} parent=0 // pred_check_branch
    %134 = sbr.rel (0) target = $region21
  $region20: #{tpu_custom_call.1} parent=0 // pred_region
    _
  $region21: #{tpu_custom_call.1} parent=0 // pred_fallthru
    _

</llo_original>
